<compile_context>
chip_gen: v5e
topology: v5e:2x2
jax: 0.10.0
libtpu: 0.0.40
codegen_flags: <defaults>
</compile_context>

<pallas_src>
import functools

import jax
import jax.numpy as jnp
from jax.experimental import pallas as pl
from jax.experimental.pallas import tpu as pltpu


def _round_up(v, m):
    return ((v + m - 1) // m) * m


def _discriminator_kernel(d_layers, x_ref, w_in_ref, w_h_ref, w_out_ref,
                          b_all_ref, b_out_ref, o_ref):
    """One batch tile. x_ref: (x_dim, TM) bf16 feature-major; h: (d_dim, TM) f32."""
    # 1st layer: Linear(x_dim -> d_dim).  bf16 operands, f32 accumulation (MXU).
    h = jnp.dot(w_in_ref[...], x_ref[...],
                preferred_element_type=jnp.float32) + b_all_ref[:, 0:1]

    # d_layers x (ReLU ; Linear(d_dim -> d_dim)), statically unrolled.
    for i in range(d_layers):
        h = jnp.maximum(h, 0.0)                                   # ReLU, f32 VPU
        h = jnp.dot(w_h_ref[i], h.astype(jnp.bfloat16),
                    preferred_element_type=jnp.float32) + b_all_ref[:, i + 1:i + 2]

    # last_activation ; last_layer Linear(d_dim -> 1), kept off the MXU:
    # VPU multiply by the lane-broadcast weight column + XLU sublane reduction
    # -> lane-dense (1, TM) output row.
    h = jnp.maximum(h, 0.0)
    out = jnp.sum(h * w_out_ref[...], axis=0, keepdims=True) + b_out_ref[0, 0]
    o_ref[...] = out.astype(o_ref.dtype)


def discriminator_forward(x, params, tm=16384):
    """x: (batch, x_dim) float32. Returns (batch, 1) float32.

    params (PyTorch nn.Linear layout, weights (out, in)):
      w_in (d_dim, x_dim), b_in (d_dim,), w_h (d_layers, d_dim, d_dim),
      b_h (d_layers, d_dim), w_out (1, d_dim), b_out (1,).
    """
    w_in, b_in, w_h, b_h, w_out, b_out = params
    batch, x_dim = x.shape
    d_layers, d_dim = w_h.shape[0], w_h.shape[1]

    # ---- tiny parameter packing / casts (negligible host work) --------------
    w_in_b = w_in.astype(jnp.bfloat16)                                   # (d_dim, x_dim)
    w_h_b = w_h.astype(jnp.bfloat16)                                     # (d_layers, d_dim, d_dim)
    w_out_col = w_out.reshape(d_dim, 1).astype(jnp.float32)              # (d_dim, 1)
    b_all = jnp.concatenate(                                             # (d_dim, d_layers+1)
        [b_in.reshape(d_dim, 1), b_h.reshape(d_layers, d_dim).T],
        axis=1).astype(jnp.float32)
    b_out_s = b_out.reshape(1, 1).astype(jnp.float32)

    # Single fused transpose + bf16 downcast of x (feature-major, 8 B/row).
    x_t = x.T.astype(jnp.bfloat16)                                       # (x_dim, batch)

    # ---- batch tiling --------------------------------------------------------
    tm = _round_up(max(int(tm), 128), 128)            # lane-align user tm
    tm = min(tm, _round_up(batch, 128))               # never larger than needed
    if _round_up(batch, 128) >= 256 and pl.cdiv(batch, tm) < 2:
        # >= 2 grid steps so both v7x TensorCores get work on the parallel axis.
        tm = _round_up(pl.cdiv(batch, 2), 128)
    n_tiles = pl.cdiv(batch, tm)                      # partial last tile is fine

    flops = batch * (2 * x_dim * d_dim + d_layers * 2 * d_dim * d_dim + 2 * d_dim)
    param_bytes = sum(int(a.size) * a.dtype.itemsize
                      for a in (w_in_b, w_h_b, w_out_col, b_all, b_out_s))
    bytes_accessed = batch * (x_dim * 2 + 4) + param_bytes

    out = pl.pallas_call(
        functools.partial(_discriminator_kernel, d_layers),
        out_shape=jax.ShapeDtypeStruct((1, n_tiles * tm), jnp.float32),
        grid=(n_tiles,),
        in_specs=[
            # Batch-tiled input (pipelined HBM->VMEM, bf16, lane-dense).
            pl.BlockSpec((x_dim, tm), lambda i: (0, i)),
            # Weights / biases: constant index_maps -> VMEM-resident across steps.
            pl.BlockSpec((d_dim, x_dim), lambda i: (0, 0)),
            pl.BlockSpec((d_layers, d_dim, d_dim), lambda i: (0, 0, 0)),
            pl.BlockSpec((d_dim, 1), lambda i: (0, 0)),
            pl.BlockSpec((d_dim, d_layers + 1), lambda i: (0, 0)),
            # Scalar output bias in SMEM.
            pl.BlockSpec(memory_space=pltpu.MemorySpace.SMEM),
        ],
        out_specs=pl.BlockSpec((1, tm), lambda i: (0, i)),
        compiler_params=pltpu.CompilerParams(
            dimension_semantics=("parallel",),
            vmem_limit_bytes=32 * 1024 * 1024,
        ),
        cost_estimate=pl.CostEstimate(flops=int(flops),
                                      transcendentals=0,
                                      bytes_accessed=int(bytes_accessed)),
    )(x_t, w_in_b, w_h_b, w_out_col, b_all, b_out_s)

    return out[0, :batch].reshape(batch, 1)


def init_params(key, x_dim, d_dim, d_layers):
    """nn.Linear-style init (uniform +-1/sqrt(fan_in)); weights (out, in)."""
    keys = jax.random.split(key, 6)

    def uni(k, shape, fan_in):
        bound = 1.0 / jnp.sqrt(jnp.asarray(fan_in, jnp.float32))
        return jax.random.uniform(k, shape, jnp.float32, -bound, bound)

    w_in = uni(keys[0], (d_dim, x_dim), x_dim)
    b_in = uni(keys[1], (d_dim,), x_dim)
    w_h = uni(keys[2], (d_layers, d_dim, d_dim), d_dim)
    b_h = uni(keys[3], (d_layers, d_dim), d_dim)
    w_out = uni(keys[4], (1, d_dim), d_dim)
    b_out = uni(keys[5], (1,), d_dim)
    return (w_in, b_in, w_h, b_h, w_out, b_out)


if __name__ == "__main__":
    # Module hyper-params (small, consistent with the PyTorch __init__).
    X_DIM = 4      # params['x_dim']
    D_DIM = 32     # params['d_dim']
    D_LAYERS = 3   # params['d_layers']
    BATCH = 300    # not a multiple of 128 -> exercises the partial edge tile

    key = jax.random.PRNGKey(0)
    k_x, k_p = jax.random.split(key)

    x = jax.random.normal(k_x, (BATCH, X_DIM), jnp.float32)
    params = init_params(k_p, X_DIM, D_DIM, D_LAYERS)

    fwd = jax.jit(functools.partial(discriminator_forward, tm=1024))
    out = jax.block_until_ready(fwd(x, params))

    # Pure-JAX reference (PyTorch nn.Linear semantics: y = x @ W.T + b),
    # mirroring the kernel's bf16 matmul operands with f32 accumulation.
    w_in, b_in, w_h, b_h, w_out, b_out = params
    xb = x.astype(jnp.bfloat16)
    h = jnp.dot(xb, w_in.astype(jnp.bfloat16).T,
                preferred_element_type=jnp.float32) + b_in
    for i in range(D_LAYERS):
        h = jnp.maximum(h, 0.0)
        h = jnp.dot(h.astype(jnp.bfloat16), w_h[i].astype(jnp.bfloat16).T,
                    preferred_element_type=jnp.float32) + b_h[i]
    h = jnp.maximum(h, 0.0)
    ref = jnp.dot(h, w_out.T, precision=jax.lax.Precision.HIGHEST) + b_out

    assert out.shape == (BATCH, 1)
    assert bool(jnp.allclose(out, ref, atol=1e-2, rtol=1e-2)), \
        float(jnp.max(jnp.abs(out - ref)))
    print("KERNEL_OK")
</pallas_src>

<mosaic_0001>
module attributes {stable_mosaic.version = 11 : i64} {
  func.func @_discriminator_kernel(%arg0: i32, %arg1: memref<4x256xbf16, #tpu.memory_space<vmem>>, %arg2: memref<32x4xbf16, #tpu.memory_space<vmem>>, %arg3: memref<3x32x32xbf16, #tpu.memory_space<vmem>>, %arg4: memref<32x1xf32, #tpu.memory_space<vmem>>, %arg5: memref<32x4xf32, #tpu.memory_space<vmem>>, %arg6: memref<1x1xf32, #tpu.memory_space<smem>>, %arg7: memref<1x256xf32, #tpu.memory_space<vmem>>) attributes {dimension_semantics = [#tpu.dimension_semantics<parallel>], iteration_bounds = array<i64: 2>, scalar_prefetch = 0 : i64, scratch_operands = 0 : i64, tpu.core_type = #tpu.core_type<tc>, window_params = [{transform_indices = @transform_0, window_bounds = array<i64: 4, 256>}, {pipeline_mode = #tpu.pipeline_mode<synchronous>, transform_indices = @transform_1, window_bounds = array<i64: 32, 4>}, {pipeline_mode = #tpu.pipeline_mode<synchronous>, transform_indices = @transform_2, window_bounds = array<i64: 3, 32, 32>}, {pipeline_mode = #tpu.pipeline_mode<synchronous>, transform_indices = @transform_3, window_bounds = array<i64: 32, 1>}, {pipeline_mode = #tpu.pipeline_mode<synchronous>, transform_indices = @transform_4, window_bounds = array<i64: 32, 4>}, {transform_indices = @transform_5, window_bounds = array<i64: 1, 1>}, {transform_indices = @transform_6, window_bounds = array<i64: 1, 256>}]} {
    %c0 = arith.constant 0 : index
    %c0_0 = arith.constant 0 : index
    %0 = vector.load %arg2[%c0, %c0_0] : memref<32x4xbf16, #tpu.memory_space<vmem>>, vector<32x4xbf16>
    %c0_1 = arith.constant 0 : index
    %c0_2 = arith.constant 0 : index
    %1 = vector.load %arg1[%c0_1, %c0_2] : memref<4x256xbf16, #tpu.memory_space<vmem>>, vector<4x256xbf16>
    %cst = arith.constant dense<0.000000e+00> : vector<32x256xf32>
    %2 = tpu.matmul %0, %1, %cst {dimension_numbers = #tpu.dot_dimension_numbers<[1], [0], [0], [1], [0, 0, 1, 1], [], []>} : vector<32x4xbf16>, vector<4x256xbf16>, vector<32x256xf32> -> vector<32x256xf32>
    %c0_3 = arith.constant 0 : index
    %c0_4 = arith.constant 0 : index
    %3 = vector.load %arg5[%c0_3, %c0_4] : memref<32x4xf32, #tpu.memory_space<vmem>>, vector<32x1xf32>
    %4 = vector.broadcast %3 : vector<32x1xf32> to vector<32x256xf32>
    %5 = arith.addf %2, %4 : vector<32x256xf32>
    %cst_5 = arith.constant 0.000000e+00 : f32
    %6 = vector.broadcast %cst_5 : f32 to vector<32x256xf32>
    %7 = arith.maximumf %5, %6 : vector<32x256xf32>
    %c0_6 = arith.constant 0 : index
    %c0_7 = arith.constant 0 : index
    %c0_8 = arith.constant 0 : index
    %8 = vector.load %arg3[%c0_6, %c0_7, %c0_8] : memref<3x32x32xbf16, #tpu.memory_space<vmem>>, vector<1x32x32xbf16>
    %9 = vector.shape_cast %8 : vector<1x32x32xbf16> to vector<32x32xbf16>
    %10 = arith.truncf %7 : vector<32x256xf32> to vector<32x256xbf16>
    %cst_9 = arith.constant dense<0.000000e+00> : vector<32x256xf32>
    %11 = tpu.matmul %9, %10, %cst_9 {dimension_numbers = #tpu.dot_dimension_numbers<[1], [0], [0], [1], [0, 0, 1, 1], [], []>} : vector<32x32xbf16>, vector<32x256xbf16>, vector<32x256xf32> -> vector<32x256xf32>
    %c0_10 = arith.constant 0 : index
    %c1 = arith.constant 1 : index
    %12 = vector.load %arg5[%c0_10, %c1] : memref<32x4xf32, #tpu.memory_space<vmem>>, vector<32x1xf32>
    %13 = vector.broadcast %12 : vector<32x1xf32> to vector<32x256xf32>
    %14 = arith.addf %11, %13 : vector<32x256xf32>
    %cst_11 = arith.constant 0.000000e+00 : f32
    %15 = vector.broadcast %cst_11 : f32 to vector<32x256xf32>
    %16 = arith.maximumf %14, %15 : vector<32x256xf32>
    %c1_12 = arith.constant 1 : index
    %c0_13 = arith.constant 0 : index
    %c0_14 = arith.constant 0 : index
    %17 = vector.load %arg3[%c1_12, %c0_13, %c0_14] : memref<3x32x32xbf16, #tpu.memory_space<vmem>>, vector<1x32x32xbf16>
    %18 = vector.shape_cast %17 : vector<1x32x32xbf16> to vector<32x32xbf16>
    %19 = arith.truncf %16 : vector<32x256xf32> to vector<32x256xbf16>
    %cst_15 = arith.constant dense<0.000000e+00> : vector<32x256xf32>
    %20 = tpu.matmul %18, %19, %cst_15 {dimension_numbers = #tpu.dot_dimension_numbers<[1], [0], [0], [1], [0, 0, 1, 1], [], []>} : vector<32x32xbf16>, vector<32x256xbf16>, vector<32x256xf32> -> vector<32x256xf32>
    %c0_16 = arith.constant 0 : index
    %c2 = arith.constant 2 : index
    %21 = vector.load %arg5[%c0_16, %c2] : memref<32x4xf32, #tpu.memory_space<vmem>>, vector<32x1xf32>
    %22 = vector.broadcast %21 : vector<32x1xf32> to vector<32x256xf32>
    %23 = arith.addf %20, %22 : vector<32x256xf32>
    %cst_17 = arith.constant 0.000000e+00 : f32
    %24 = vector.broadcast %cst_17 : f32 to vector<32x256xf32>
    %25 = arith.maximumf %23, %24 : vector<32x256xf32>
    %c2_18 = arith.constant 2 : index
    %c0_19 = arith.constant 0 : index
    %c0_20 = arith.constant 0 : index
    %26 = vector.load %arg3[%c2_18, %c0_19, %c0_20] : memref<3x32x32xbf16, #tpu.memory_space<vmem>>, vector<1x32x32xbf16>
    %27 = vector.shape_cast %26 : vector<1x32x32xbf16> to vector<32x32xbf16>
    %28 = arith.truncf %25 : vector<32x256xf32> to vector<32x256xbf16>
    %cst_21 = arith.constant dense<0.000000e+00> : vector<32x256xf32>
    %29 = tpu.matmul %27, %28, %cst_21 {dimension_numbers = #tpu.dot_dimension_numbers<[1], [0], [0], [1], [0, 0, 1, 1], [], []>} : vector<32x32xbf16>, vector<32x256xbf16>, vector<32x256xf32> -> vector<32x256xf32>
    %c0_22 = arith.constant 0 : index
    %c3 = arith.constant 3 : index
    %30 = vector.load %arg5[%c0_22, %c3] : memref<32x4xf32, #tpu.memory_space<vmem>>, vector<32x1xf32>
    %31 = vector.broadcast %30 : vector<32x1xf32> to vector<32x256xf32>
    %32 = arith.addf %29, %31 : vector<32x256xf32>
    %cst_23 = arith.constant 0.000000e+00 : f32
    %33 = vector.broadcast %cst_23 : f32 to vector<32x256xf32>
    %34 = arith.maximumf %32, %33 : vector<32x256xf32>
    %c0_24 = arith.constant 0 : index
    %c0_25 = arith.constant 0 : index
    %35 = vector.load %arg4[%c0_24, %c0_25] : memref<32x1xf32, #tpu.memory_space<vmem>>, vector<32x1xf32>
    %36 = vector.broadcast %35 : vector<32x1xf32> to vector<32x256xf32>
    %37 = arith.mulf %34, %36 : vector<32x256xf32>
    %cst_26 = arith.constant dense<0.000000e+00> : vector<256xf32>
    %38 = vector.multi_reduction <add>, %37, %cst_26 [0] : vector<32x256xf32> to vector<256xf32>
    %39 = vector.shape_cast %38 : vector<256xf32> to vector<1x256xf32>
    %c0_27 = arith.constant 0 : index
    %c0_28 = arith.constant 0 : index
    %40 = memref.load %arg6[%c0_27, %c0_28] : memref<1x1xf32, #tpu.memory_space<smem>>
    %41 = vector.broadcast %40 : f32 to vector<1x256xf32>
    %42 = arith.addf %39, %41 : vector<1x256xf32>
    %c0_29 = arith.constant 0 : index
    %c0_30 = arith.constant 0 : index
    %43 = vector.load %arg7[%c0_29, %c0_30] : memref<1x256xf32, #tpu.memory_space<vmem>>, vector<1x256xf32>
    tpu.vector_store %arg7[%c0_29, %c0_30], %42 {strides = array<i32>} : memref<1x256xf32, #tpu.memory_space<vmem>>, vector<1x256xf32>,
    return
  }
  func.func @transform_0(%arg0: i32) -> (i32, i32) {
    %c0_i32 = arith.constant 0 : i32
    %c0_i32_0 = arith.constant 0 : i32
    return %c0_i32, %arg0 : i32, i32
  }
  func.func @transform_1(%arg0: i32) -> (i32, i32) {
    %c0_i32 = arith.constant 0 : i32
    %c0_i32_0 = arith.constant 0 : i32
    %c0_i32_1 = arith.constant 0 : i32
    return %c0_i32, %c0_i32_0 : i32, i32
  }
  func.func @transform_2(%arg0: i32) -> (i32, i32, i32) {
    %c0_i32 = arith.constant 0 : i32
    %c0_i32_0 = arith.constant 0 : i32
    %c0_i32_1 = arith.constant 0 : i32
    %c0_i32_2 = arith.constant 0 : i32
    return %c0_i32, %c0_i32_0, %c0_i32_1 : i32, i32, i32
  }
  func.func @transform_3(%arg0: i32) -> (i32, i32) {
    %c0_i32 = arith.constant 0 : i32
    %c0_i32_0 = arith.constant 0 : i32
    %c0_i32_1 = arith.constant 0 : i32
    return %c0_i32, %c0_i32_0 : i32, i32
  }
  func.func @transform_4(%arg0: i32) -> (i32, i32) {
    %c0_i32 = arith.constant 0 : i32
    %c0_i32_0 = arith.constant 0 : i32
    %c0_i32_1 = arith.constant 0 : i32
    return %c0_i32, %c0_i32_0 : i32, i32
  }
  func.func @transform_5(%arg0: i32) -> (i32, i32) {
    %c0_i32 = arith.constant 0 : i32
    %c0_i32_0 = arith.constant 0 : i32
    %c0_i32_1 = arith.constant 0 : i32
    return %c0_i32, %c0_i32_0 : i32, i32
  }
  func.func @transform_6(%arg0: i32) -> (i32, i32) {
    %c0_i32 = arith.constant 0 : i32
    %c0_i32_0 = arith.constant 0 : i32
    return %c0_i32, %arg0 : i32, i32
  }
}

</mosaic_0001>

<llo_original>
// kernel: discriminator_forward.1
$region0: #{discriminator_forward.1}
  #allocation0 [shape = 'u32[]', space=smem, size = 0x4, offset = 0x4, fixed_abs, tag = 'smem constant byte address 0x4 - core index']
  #allocation1 [shape = 'u32[72,128]{1,0:T(1,128)}', space=vmem, size = 0x9000, scoped, tag = 'internal scratch']
  #allocation2 [shape = 'f32[1,1]{1,0:T(1,128)S(6)}', space=smem, size = 0x200, scoped, tag = 'scoped memory for discriminator_forward.1']
  %s0 = inlined_call_operand.vmem [shape: bf16[4,300], index: 0, kind: input, shape index: {}]
  %s1 = inlined_call_operand.vmem [shape: bf16[32,4], index: 1, kind: input, shape index: {}]
  %s2 = inlined_call_operand.vmem [shape: bf16[3,32,32], index: 2, kind: input, shape index: {}]
  %s3 = inlined_call_operand.vmem [shape: f32[32,1], index: 3, kind: input, shape index: {}]
  %s4 = inlined_call_operand.vmem [shape: f32[32,4], index: 4, kind: input, shape index: {}]
  %s5 = inlined_call_operand.<no memory space> [shape: f32[1,1], index: 5, kind: input, shape index: {}]
  %s6 = inlined_call_operand.vmem [shape: f32[1,512], index: 6, kind: output, shape index: {}]
  %s7 = sld [smem:[#allocation0]]
  $region57: #{discriminator_forward.1} parent=0
    _
  %s9 = ssub.s32 1, %s7
  %s10 = scalar_select 0, %s9, %s7
  %11 = sst [smem:[#allocation2]] %s5
  loop: start=0, step=1, limit=4
  $region2: #{discriminator_forward.1} parent=0 // loop_pre_header
    _
  $region3: #{discriminator_forward.1} parent=0 // loop_header
    %s13 = sphi 0, %s17
    %p14 = scmp.ge.s32.totalorder %s13, 4
    %s23 = sphi 0, %s25
    %s26 = sphi 0, %s23
    %s27 = sphi 0, %s26
    %s43 = sphi 0, %s27
    %s47 = sphi 0, %s47
    %s49 = sphi 0, %s47
    %s50 = sphi 0, %s49
    %s64 = sphi 0, %s50
    %s68 = sphi 0, %s68
    %s70 = sphi 0, %s68
    %s71 = sphi 0, %s70
    %s85 = sphi 0, %s71
    %s89 = sphi 0, %s89
    %s91 = sphi 0, %s89
    %s92 = sphi 0, %s91
    %s106 = sphi 0, %s92
    %s110 = sphi 0, %s110
    %s112 = sphi 0, %s110
    %s113 = sphi 0, %s112
    %s127 = sphi 0, %s113
    %s131 = sphi 0, %s131
    %s133 = sphi 0, %s131
    %s134 = sphi 0, %s133
    %s148 = sphi 0, %s134
    %s154 = sphi 0, %s156
    %s157 = sphi 0, %s154
    %s158 = sphi 0, %s157
    %s174 = sphi 0, %s158
  $region4: #{discriminator_forward.1} parent=0 // loop_header_branch
    %16 = sbr.rel (%p14) target = $region8
  $region5: #{discriminator_forward.1} parent=0 // loop_body
    %s18 = ssub.s32 %s13, 1
    %s19 = ssub.s32 %s13, 2
    %s20 = sadd.s32 %s13, 1
    %s21 = ssub.s32 %s13, %s20
    %p22 = scmp.eq.s32.totalorder %s21, 0
    %s24 = sadd.s32 %s23, 1
    %s25 = scalar_select %p22, %s23, %s24
    %p28 = pneg %p22
    %p29 = scmp.eq.s32.totalorder %s13, 1
    %p30 = por %p28, %p29
    %p31 = scmp.ne.s32.totalorder %s23, %s26
    %p32 = scmp.eq.s32.totalorder %s13, 0
    %p33 = por %p31, %p32
    %p34 = scmp.ne.s32.totalorder %s23, %s26
    %p35 = scmp.eq.s32.totalorder %s18, 1
    %p36 = por %p34, %p35
    %p37 = scmp.ne.s32.totalorder %s26, %s27
    %p38 = scmp.eq.s32.totalorder %s18, 0
    %p39 = por %p37, %p38
    %p40 = scmp.ne.s32.totalorder %s26, %s27
    %p41 = scmp.eq.s32.totalorder %s19, 1
    %p42 = por %p40, %p41
    %p44 = scmp.ne.s32.totalorder %s27, %s43
    %p45 = scmp.eq.s32.totalorder %s19, 0
    %p46 = por %p44, %p45
    %s48 = sadd.s32 %s47, 1
    %p51 = scmp.eq.s32.totalorder %s13, 1
    %p52 = scmp.ne.s32.totalorder %s47, %s49
    %p53 = scmp.eq.s32.totalorder %s13, 0
    %p54 = por %p52, %p53
    %p55 = scmp.ne.s32.totalorder %s47, %s49
    %p56 = scmp.eq.s32.totalorder %s18, 1
    %p57 = por %p55, %p56
    %p58 = scmp.ne.s32.totalorder %s49, %s50
    %p59 = scmp.eq.s32.totalorder %s18, 0
    %p60 = por %p58, %p59
    %p61 = scmp.ne.s32.totalorder %s49, %s50
    %p62 = scmp.eq.s32.totalorder %s19, 1
    %p63 = por %p61, %p62
    %p65 = scmp.ne.s32.totalorder %s50, %s64
    %p66 = scmp.eq.s32.totalorder %s19, 0
    %p67 = por %p65, %p66
    %s69 = sadd.s32 %s68, 1
    %p72 = scmp.eq.s32.totalorder %s13, 1
    %p73 = scmp.ne.s32.totalorder %s68, %s70
    %p74 = scmp.eq.s32.totalorder %s13, 0
    %p75 = por %p73, %p74
    %p76 = scmp.ne.s32.totalorder %s68, %s70
    %p77 = scmp.eq.s32.totalorder %s18, 1
    %p78 = por %p76, %p77
    %p79 = scmp.ne.s32.totalorder %s70, %s71
    %p80 = scmp.eq.s32.totalorder %s18, 0
    %p81 = por %p79, %p80
    %p82 = scmp.ne.s32.totalorder %s70, %s71
    %p83 = scmp.eq.s32.totalorder %s19, 1
    %p84 = por %p82, %p83
    %p86 = scmp.ne.s32.totalorder %s71, %s85
    %p87 = scmp.eq.s32.totalorder %s19, 0
    %p88 = por %p86, %p87
    %s90 = sadd.s32 %s89, 1
    %p93 = scmp.eq.s32.totalorder %s13, 1
    %p94 = scmp.ne.s32.totalorder %s89, %s91
    %p95 = scmp.eq.s32.totalorder %s13, 0
    %p96 = por %p94, %p95
    %p97 = scmp.ne.s32.totalorder %s89, %s91
    %p98 = scmp.eq.s32.totalorder %s18, 1
    %p99 = por %p97, %p98
    %p100 = scmp.ne.s32.totalorder %s91, %s92
    %p101 = scmp.eq.s32.totalorder %s18, 0
    %p102 = por %p100, %p101
    %p103 = scmp.ne.s32.totalorder %s91, %s92
    %p104 = scmp.eq.s32.totalorder %s19, 1
    %p105 = por %p103, %p104
    %p107 = scmp.ne.s32.totalorder %s92, %s106
    %p108 = scmp.eq.s32.totalorder %s19, 0
    %p109 = por %p107, %p108
    %s111 = sadd.s32 %s110, 1
    %p114 = scmp.eq.s32.totalorder %s13, 1
    %p115 = scmp.ne.s32.totalorder %s110, %s112
    %p116 = scmp.eq.s32.totalorder %s13, 0
    %p117 = por %p115, %p116
    %p118 = scmp.ne.s32.totalorder %s110, %s112
    %p119 = scmp.eq.s32.totalorder %s18, 1
    %p120 = por %p118, %p119
    %p121 = scmp.ne.s32.totalorder %s112, %s113
    %p122 = scmp.eq.s32.totalorder %s18, 0
    %p123 = por %p121, %p122
    %p124 = scmp.ne.s32.totalorder %s112, %s113
    %p125 = scmp.eq.s32.totalorder %s19, 1
    %p126 = por %p124, %p125
    %p128 = scmp.ne.s32.totalorder %s113, %s127
    %p129 = scmp.eq.s32.totalorder %s19, 0
    %p130 = por %p128, %p129
    %s132 = sadd.s32 %s131, 1
    %p135 = scmp.eq.s32.totalorder %s13, 1
    %p136 = scmp.ne.s32.totalorder %s131, %s133
    %p137 = scmp.eq.s32.totalorder %s13, 0
    %p138 = por %p136, %p137
    %p139 = scmp.ne.s32.totalorder %s131, %s133
    %p140 = scmp.eq.s32.totalorder %s18, 1
    %p141 = por %p139, %p140
    %p142 = scmp.ne.s32.totalorder %s133, %s134
    %p143 = scmp.eq.s32.totalorder %s18, 0
    %p144 = por %p142, %p143
    %p145 = scmp.ne.s32.totalorder %s133, %s134
    %p146 = scmp.eq.s32.totalorder %s19, 1
    %p147 = por %p145, %p146
    %p149 = scmp.ne.s32.totalorder %s134, %s148
    %p150 = scmp.eq.s32.totalorder %s19, 0
    %p151 = por %p149, %p150
    %s152 = ssub.s32 %s13, %s20
    %p153 = scmp.eq.s32.totalorder %s152, 0
    %s155 = sadd.s32 %s154, 1
    %s156 = scalar_select %p153, %s154, %s155
    %p159 = pneg %p153
    %p160 = scmp.eq.s32.totalorder %s13, 1
    %p161 = por %p159, %p160
    %p162 = scmp.ne.s32.totalorder %s154, %s157
    %p163 = scmp.eq.s32.totalorder %s13, 0
    %p164 = por %p162, %p163
    %p165 = scmp.ne.s32.totalorder %s154, %s157
    %p166 = scmp.eq.s32.totalorder %s18, 1
    %p167 = por %p165, %p166
    %p168 = scmp.ne.s32.totalorder %s157, %s158
    %p169 = scmp.eq.s32.totalorder %s18, 0
    %p170 = por %p168, %p169
    %p171 = scmp.ne.s32.totalorder %s157, %s158
    %p172 = scmp.eq.s32.totalorder %s19, 1
    %p173 = por %p171, %p172
    %p175 = scmp.ne.s32.totalorder %s158, %s174
    %p176 = scmp.eq.s32.totalorder %s19, 0
    %p177 = por %p175, %p176
    %p178 = scmp.le.s32.totalorder 1, %s13
    %p179 = scmp.lt.s32.totalorder %s13, 3
    %p180 = pnand %p178, %p179
    %p181 = pneg %p180
    // Predicated region
    $region9: #{discriminator_forward.1} parent=5 // pred_check
      _
    $region10: #{discriminator_forward.1} parent=5 // pred_check_branch
      %183 = sbr.rel (%p180) target = $region12
    $region11: #{discriminator_forward.1} parent=5 // pred_region
      %s184 = ssub.s32 %s13, 1
      // Predicated region
      $region13: #{discriminator_forward.1} parent=11 // pred_check
        %p185 = pneg %p60
      $region14: #{discriminator_forward.1} parent=11 // pred_check_branch
        %187 = sbr.rel (%p185) target = $region16
      $region15: #{discriminator_forward.1} parent=11 // pred_region
        _
      $region16: #{discriminator_forward.1} parent=11 // pred_fallthru
        _
      // Predicated region
      $region17: #{discriminator_forward.1} parent=11 // pred_check
        %p188 = pneg %p81
      $region18: #{discriminator_forward.1} parent=11 // pred_check_branch
        %190 = sbr.rel (%p188) target = $region20
      $region19: #{discriminator_forward.1} parent=11 // pred_region
        _
      $region20: #{discriminator_forward.1} parent=11 // pred_fallthru
        _
      // Predicated region
      $region21: #{discriminator_forward.1} parent=11 // pred_check
        %p191 = pneg %p102
      $region22: #{discriminator_forward.1} parent=11 // pred_check_branch
        %193 = sbr.rel (%p191) target = $region24
      $region23: #{discriminator_forward.1} parent=11 // pred_region
        _
      $region24: #{discriminator_forward.1} parent=11 // pred_fallthru
        _
      // Predicated region
      $region25: #{discriminator_forward.1} parent=11 // pred_check
        %p194 = pneg %p123
      $region26: #{discriminator_forward.1} parent=11 // pred_check_branch
        %196 = sbr.rel (%p194) target = $region28
      $region27: #{discriminator_forward.1} parent=11 // pred_region
        _
      $region28: #{discriminator_forward.1} parent=11 // pred_fallthru
        _
      // Predicated region
      $region29: #{discriminator_forward.1} parent=11 // pred_check
        %p197 = pneg %p144
      $region30: #{discriminator_forward.1} parent=11 // pred_check_branch
        %199 = sbr.rel (%p197) target = $region32
      $region31: #{discriminator_forward.1} parent=11 // pred_region
        _
      $region32: #{discriminator_forward.1} parent=11 // pred_fallthru
        _
    $region12: #{discriminator_forward.1} parent=5 // pred_fallthru
      _
    %p200 = scmp.lt.s32.totalorder %s13, 2
    // Predicated region
    $region33: #{discriminator_forward.1} parent=5 // pred_check
      %p201 = pneg %p200
    $region34: #{discriminator_forward.1} parent=5 // pred_check_branch
      %203 = sbr.rel (%p201) target = $region36
    $region35: #{discriminator_forward.1} parent=5 // pred_region
      // Predicated region
      $region37: #{discriminator_forward.1} parent=35 // pred_check
        %p204 = pneg %p33
      $region38: #{discriminator_forward.1} parent=35 // pred_check_branch
        %206 = sbr.rel (%p204) target = $region40
      $region39: #{discriminator_forward.1} parent=35 // pred_region
        %s207 = smul.u32 2, %s13
        %s208 = ssub.s32 3, %s207
        %p209 = scmp.lt.s32.totalorder %s208, 2
        %s210 = scalar_select %p209, %s208, 2
        %s211 = smul.u32 2, %s210
        %p212 = scmp.lt.s32.totalorder %s207, 2
        %s213 = scalar_select %p212, %s207, 2
        %s214 = smul.addr %s213, 2
        %s215 = scalar_lea.vmem %s0, %s214
        %s216 = smul.u32 2, %s13
        %s217 = ssub.s32 3, %s216
        %p218 = scmp.lt.s32.totalorder %s217, 2
        %s219 = scalar_select %p218, %s217, 2
        %s220 = smul.u32 2, %s219
      $region40: #{discriminator_forward.1} parent=35 // pred_fallthru
        _
    $region36: #{discriminator_forward.1} parent=5 // pred_fallthru
      _
    %p221 = scmp.le.s32.totalorder 1, %s13
    %p222 = scmp.lt.s32.totalorder %s13, 3
    %p223 = pnand %p221, %p222
    %p224 = pneg %p223
    // Predicated region
    $region41: #{discriminator_forward.1} parent=5 // pred_check
      _
    $region42: #{discriminator_forward.1} parent=5 // pred_check_branch
      %226 = sbr.rel (%p223) target = $region44
    $region43: #{discriminator_forward.1} parent=5 // pred_region
      %s227 = ssub.s32 %s13, 1
      %s228 = smul.u32 2, %s18
      %s229 = ssub.s32 3, %s228
      %p230 = scmp.lt.s32.totalorder %s229, 2
      %s231 = scalar_select %p230, %s229, 2
      %s232 = smul.u32 2, %s231
      %p233 = scmp.lt.s32.totalorder %s228, 2
      %s234 = scalar_select %p233, %s228, 2
      %s235 = smul.addr %s234, 2
      %s236 = scalar_lea.vmem %s0, %s235
      %p237 = pneg %p39
      %p238 = pneg %p36
      %p239 = pneg %p60
      %p240 = pneg %p57
      %p241 = pneg %p81
      %p242 = pneg %p78
      %p243 = pneg %p102
      %p244 = pneg %p99
      %p245 = pneg %p123
      %p246 = pneg %p120
      %p247 = pneg %p144
      %p248 = pneg %p141
      %p249 = pneg %p170
      %p250 = pneg %p167
      %s251 = smul.u32 2, %s18
      %p252 = scmp.lt.s32.totalorder %s251, 3
      %s253 = scalar_select %p252, %s251, 3
      %s254 = scalar_lea.vmem %s6, %s253
      %s255 = smul.u32 2, %s18
      %s256 = ssub.s32 3, %s255
      %p257 = scmp.lt.s32.totalorder %s256, 2
      %s258 = scalar_select %p257, %s256, 2
      %s259 = smul.u32 2, %s258
      %p260 = scmp.lt.s32.totalorder %s255, 2
      %s261 = scalar_select %p260, %s255, 2
      %s262 = smul.addr %s261, 2
      %s263 = scalar_lea.vmem %s0, %s262
      %s264 = smul.u32 2, %s18
      %s265 = ssub.s32 3, %s264
      %p266 = scmp.lt.s32.totalorder %s265, 2
      %s267 = scalar_select %p266, %s265, 2
      %s268 = smul.u32 2, %s267
      %s269 = smul.u32 2, %s18
      %p270 = scmp.lt.s32.totalorder %s269, 3
      %s271 = scalar_select %p270, %s269, 3
      %s272 = scalar_lea.vmem %s6, %s271
      %s273 = smul.u32 2, %s18
      %v275 = vld [vmem:[%s1] sm:$0xf]
      %v276 = vld [vmem:[%s1 + $0x4] sm:$0xf]
      %v277 = vld [vmem:[%s1 + $0x8] sm:$0xf]
      %v278 = vld [vmem:[%s1 + $0xc] sm:$0xf]
      %v279 = vld [vmem:[%s263] sm:$0xf]
      %v280 = vld [vmem:[%s4] sm:$0xff]
      %v281 = vld [vmem:[%s4 + $0x8] sm:$0xff]
      %v282 = vld [vmem:[%s4 + $0x10] sm:$0xff]
      %v283 = vld [vmem:[%s4 + $0x18] sm:$0xff]
      %285 = vset.pattern.permute.xlu0 0
      %286 = vperm.xlu0 %285, %v280
      %v287 = vpop.permute.xlu0 %286
      %290 = vset.pattern.permute.xlu0 0
      %291 = vperm.xlu0 %290, %v281
      %v292 = vpop.permute.xlu0 %291
      %295 = vset.pattern.permute.xlu0 0
      %296 = vperm.xlu0 %295, %v282
      %v297 = vpop.permute.xlu0 %296
      %300 = vset.pattern.permute.xlu0 0
      %301 = vperm.xlu0 %300, %v283
      %v302 = vpop.permute.xlu0 %301
      %v308 = vunpack.c.l.b16 %v275
      %v309 = vunpack.c.l.b16 %v276
      %v310 = vunpack.c.l.b16 %v277
      %v311 = vunpack.c.l.b16 %v278
      %v312 = vpack.c.b16 %v309, %v308
      %v313 = vpack.c.b16 %v311, %v310
      %315 = vst [vmem:[#allocation1] ss:$4 sm:$0xff] %v279
      %v316 = vld.sshfl [vmem:[#allocation1] sm:$0xff pattern:$0x73625140]
      %v317 = vld.sshfl [vmem:[#allocation1 + $0x8] sm:$0xff pattern:$0x73625140]
      %vm318 = vcmask 31744
      %v320 = vsel %vm318, %v312, 0
      %v323 = vsel %vm318, %v313, 0
      %vm325 = vcmask 1041408
      %v326 = vsel %vm325, %v316, 0
      %v328 = vsel %vm325, %v317, 0
      %330 = vmatpush.bf16.msra.mxu0 0
      %331 = vmatpush.bf16.msra.mxu0 0
      %332 = vmatpush.bf16.msra.mxu0 0
      %333 = vmatpush.bf16.msra.mxu0 0
      %334 = vmatpush.bf16.msra.mxu0 0
      %335 = vmatpush.bf16.msra.mxu0 0
      %336 = vmatpush.bf16.msra.mxu0 0
      %337 = vmatpush.bf16.msra.mxu0 %v326
      %338 = vmatmul.bf16.gmra.mxu0 %v320
      %v339 = vpop.f32.mrf.mxu0
      %v340 = vadd.f32 %v287, %v339
      %v341 = vpop.f32.mrf.mxu0
      %v342 = vadd.f32 %v292, %v341
      %343 = vmatmul.bf16.gmra.mxu0 %v323
      %v344 = vpop.f32.mrf.mxu0
      %v345 = vadd.f32 %v297, %v344
      %v346 = vpop.f32.mrf.mxu0
      %v347 = vadd.f32 %v302, %v346
      %348 = vdwg.mxu0
      %349 = vmatpush.bf16.msra.mxu0 0
      %350 = vmatpush.bf16.msra.mxu0 0
      %351 = vmatpush.bf16.msra.mxu0 0
      %352 = vmatpush.bf16.msra.mxu0 0
      %353 = vmatpush.bf16.msra.mxu0 0
      %354 = vmatpush.bf16.msra.mxu0 0
      %355 = vmatpush.bf16.msra.mxu0 0
      %356 = vmatpush.bf16.msra.mxu0 %v328
      %357 = vmatmul.bf16.gmra.mxu0 %v320
      %v358 = vpop.f32.mrf.mxu0
      %v359 = vadd.f32 %v287, %v358
      %v360 = vpop.f32.mrf.mxu0
      %v361 = vadd.f32 %v292, %v360
      %362 = vmatmul.bf16.gmra.mxu0 %v323
      %v363 = vpop.f32.mrf.mxu0
      %v364 = vadd.f32 %v297, %v363
      %v365 = vpop.f32.mrf.mxu0
      %v366 = vadd.f32 %v302, %v365
      %367 = vdwg.mxu0
      %v368 = vmax.f32 %v340, 0.0
      %v369 = vmax.f32 %v359, 0.0
      %v370 = vmax.f32 %v342, 0.0
      %v371 = vmax.f32 %v361, 0.0
      %v372 = vmax.f32 %v345, 0.0
      %v373 = vmax.f32 %v364, 0.0
      %v374 = vmax.f32 %v347, 0.0
      %v375 = vmax.f32 %v366, 0.0
      %v376 = vld [vmem:[%s2] sm:$0xf]
      %v377 = vld [vmem:[%s2 + $0x4] sm:$0xf]
      %v378 = vld [vmem:[%s2 + $0x8] sm:$0xf]
      %v379 = vld [vmem:[%s2 + $0xc] sm:$0xf]
      %v380 = vpack.c.bf16 %v370, %v368
      %v381 = vpack.c.bf16 %v371, %v369
      %v382 = vpack.c.bf16 %v374, %v372
      %v383 = vpack.c.bf16 %v375, %v373
      %v384 = vld [vmem:[%s4] sm:$0xff]
      %v385 = vld [vmem:[%s4 + $0x8] sm:$0xff]
      %v386 = vld [vmem:[%s4 + $0x10] sm:$0xff]
      %v387 = vld [vmem:[%s4 + $0x18] sm:$0xff]
      %389 = vset.pattern.permute.xlu0 1
      %390 = vperm.xlu0 %389, %v384
      %v391 = vpop.permute.xlu0 %390
      %394 = vset.pattern.permute.xlu0 1
      %395 = vperm.xlu0 %394, %v385
      %v396 = vpop.permute.xlu0 %395
      %399 = vset.pattern.permute.xlu0 1
      %400 = vperm.xlu0 %399, %v386
      %v401 = vpop.permute.xlu0 %400
      %404 = vset.pattern.permute.xlu0 1
      %405 = vperm.xlu0 %404, %v387
      %v406 = vpop.permute.xlu0 %405
      %v412 = vunpack.c.l.b16 %v376
      %v413 = vunpack.c.l.b16 %v377
      %v414 = vunpack.c.l.b16 %v378
      %v415 = vunpack.c.l.b16 %v379
      %v416 = vpack.c.b16 %v413, %v412
      %v417 = vpack.c.b16 %v415, %v414
      %vm418 = vcmask 261120
      %v420 = vsel %vm418, %v416, 0
      %v423 = vsel %vm418, %v417, 0
      %425 = vmatpush.bf16.msra.mxu0 0
      %426 = vmatpush.bf16.msra.mxu0 0
      %427 = vmatpush.bf16.msra.mxu0 0
      %428 = vmatpush.bf16.msra.mxu0 0
      %429 = vmatpush.bf16.msra.mxu0 0
      %430 = vmatpush.bf16.msra.mxu0 0
      %431 = vmatpush.bf16.msra.mxu0 %v382
      %432 = vmatpush.bf16.msra.mxu0 %v380
      %433 = vmatmul.bf16.gmra.mxu0 %v420
      %v434 = vpop.f32.mrf.mxu0
      %v435 = vadd.f32 %v391, %v434
      %v436 = vpop.f32.mrf.mxu0
      %v437 = vadd.f32 %v396, %v436
      %438 = vmatmul.bf16.gmra.mxu0 %v423
      %v439 = vpop.f32.mrf.mxu0
      %v440 = vadd.f32 %v401, %v439
      %v441 = vpop.f32.mrf.mxu0
      %v442 = vadd.f32 %v406, %v441
      %443 = vdwg.mxu0
      %444 = vmatpush.bf16.msra.mxu0 0
      %445 = vmatpush.bf16.msra.mxu0 0
      %446 = vmatpush.bf16.msra.mxu0 0
      %447 = vmatpush.bf16.msra.mxu0 0
      %448 = vmatpush.bf16.msra.mxu0 0
      %449 = vmatpush.bf16.msra.mxu0 0
      %450 = vmatpush.bf16.msra.mxu0 %v383
      %451 = vmatpush.bf16.msra.mxu0 %v381
      %452 = vmatmul.bf16.gmra.mxu0 %v420
      %v453 = vpop.f32.mrf.mxu0
      %v454 = vadd.f32 %v391, %v453
      %v455 = vpop.f32.mrf.mxu0
      %v456 = vadd.f32 %v396, %v455
      %457 = vmatmul.bf16.gmra.mxu0 %v423
      %v458 = vpop.f32.mrf.mxu0
      %v459 = vadd.f32 %v401, %v458
      %v460 = vpop.f32.mrf.mxu0
      %v461 = vadd.f32 %v406, %v460
      %462 = vdwg.mxu0
      %v463 = vmax.f32 %v435, 0.0
      %v464 = vmax.f32 %v454, 0.0
      %v465 = vmax.f32 %v437, 0.0
      %v466 = vmax.f32 %v456, 0.0
      %v467 = vmax.f32 %v440, 0.0
      %v468 = vmax.f32 %v459, 0.0
      %v469 = vmax.f32 %v442, 0.0
      %v470 = vmax.f32 %v461, 0.0
      %s471 = scalar_lea.vmem %s2, 16
      %v472 = vld [vmem:[%s471] sm:$0xf]
      %v473 = vld [vmem:[%s471 + $0x4] sm:$0xf]
      %v474 = vld [vmem:[%s471 + $0x8] sm:$0xf]
      %v475 = vld [vmem:[%s471 + $0xc] sm:$0xf]
      %v476 = vpack.c.bf16 %v465, %v463
      %v477 = vpack.c.bf16 %v466, %v464
      %v478 = vpack.c.bf16 %v469, %v467
      %v479 = vpack.c.bf16 %v470, %v468
      %480 = vset.pattern.permute.xlu0 2
      %481 = vperm.xlu0 %480, %v384
      %v482 = vpop.permute.xlu0 %481
      %484 = vset.pattern.permute.xlu0 2
      %485 = vperm.xlu0 %484, %v385
      %v486 = vpop.permute.xlu0 %485
      %488 = vset.pattern.permute.xlu0 2
      %489 = vperm.xlu0 %488, %v386
      %v490 = vpop.permute.xlu0 %489
      %492 = vset.pattern.permute.xlu0 2
      %493 = vperm.xlu0 %492, %v387
      %v494 = vpop.permute.xlu0 %493
      %v500 = vunpack.c.l.b16 %v472
      %v501 = vunpack.c.l.b16 %v473
      %v502 = vunpack.c.l.b16 %v474
      %v503 = vunpack.c.l.b16 %v475
      %v504 = vpack.c.b16 %v501, %v500
      %v505 = vpack.c.b16 %v503, %v502
      %v507 = vsel %vm418, %v504, 0
      %v510 = vsel %vm418, %v505, 0
      %512 = vmatpush.bf16.msra.mxu0 0
      %513 = vmatpush.bf16.msra.mxu0 0
      %514 = vmatpush.bf16.msra.mxu0 0
      %515 = vmatpush.bf16.msra.mxu0 0
      %516 = vmatpush.bf16.msra.mxu0 0
      %517 = vmatpush.bf16.msra.mxu0 0
      %518 = vmatpush.bf16.msra.mxu0 %v478
      %519 = vmatpush.bf16.msra.mxu0 %v476
      %520 = vmatmul.bf16.gmra.mxu0 %v507
      %v521 = vpop.f32.mrf.mxu0
      %v522 = vadd.f32 %v482, %v521
      %v523 = vpop.f32.mrf.mxu0
      %v524 = vadd.f32 %v486, %v523
      %525 = vmatmul.bf16.gmra.mxu0 %v510
      %v526 = vpop.f32.mrf.mxu0
      %v527 = vadd.f32 %v490, %v526
      %v528 = vpop.f32.mrf.mxu0
      %v529 = vadd.f32 %v494, %v528
      %530 = vdwg.mxu0
      %531 = vmatpush.bf16.msra.mxu0 0
      %532 = vmatpush.bf16.msra.mxu0 0
      %533 = vmatpush.bf16.msra.mxu0 0
      %534 = vmatpush.bf16.msra.mxu0 0
      %535 = vmatpush.bf16.msra.mxu0 0
      %536 = vmatpush.bf16.msra.mxu0 0
      %537 = vmatpush.bf16.msra.mxu0 %v479
      %538 = vmatpush.bf16.msra.mxu0 %v477
      %539 = vmatmul.bf16.gmra.mxu0 %v507
      %v540 = vpop.f32.mrf.mxu0
      %v541 = vadd.f32 %v482, %v540
      %v542 = vpop.f32.mrf.mxu0
      %v543 = vadd.f32 %v486, %v542
      %544 = vmatmul.bf16.gmra.mxu0 %v510
      %v545 = vpop.f32.mrf.mxu0
      %v546 = vadd.f32 %v490, %v545
      %v547 = vpop.f32.mrf.mxu0
      %v548 = vadd.f32 %v494, %v547
      %549 = vdwg.mxu0
      %v550 = vmax.f32 %v522, 0.0
      %v551 = vmax.f32 %v541, 0.0
      %v552 = vmax.f32 %v524, 0.0
      %v553 = vmax.f32 %v543, 0.0
      %v554 = vmax.f32 %v527, 0.0
      %v555 = vmax.f32 %v546, 0.0
      %v556 = vmax.f32 %v529, 0.0
      %v557 = vmax.f32 %v548, 0.0
      %s558 = scalar_lea.vmem %s2, 32
      %v559 = vld [vmem:[%s558] sm:$0xf]
      %v560 = vld [vmem:[%s558 + $0x4] sm:$0xf]
      %v561 = vld [vmem:[%s558 + $0x8] sm:$0xf]
      %v562 = vld [vmem:[%s558 + $0xc] sm:$0xf]
      %v563 = vpack.c.bf16 %v552, %v550
      %v564 = vpack.c.bf16 %v553, %v551
      %v565 = vpack.c.bf16 %v556, %v554
      %v566 = vpack.c.bf16 %v557, %v555
      %567 = vset.pattern.permute.xlu0 3
      %568 = vperm.xlu0 %567, %v384
      %v569 = vpop.permute.xlu0 %568
      %571 = vset.pattern.permute.xlu0 3
      %572 = vperm.xlu0 %571, %v385
      %v573 = vpop.permute.xlu0 %572
      %575 = vset.pattern.permute.xlu0 3
      %576 = vperm.xlu0 %575, %v386
      %v577 = vpop.permute.xlu0 %576
      %579 = vset.pattern.permute.xlu0 3
      %580 = vperm.xlu0 %579, %v387
      %v581 = vpop.permute.xlu0 %580
      %v587 = vunpack.c.l.b16 %v559
      %v588 = vunpack.c.l.b16 %v560
      %v589 = vunpack.c.l.b16 %v561
      %v590 = vunpack.c.l.b16 %v562
      %v591 = vpack.c.b16 %v588, %v587
      %v592 = vpack.c.b16 %v590, %v589
      %v594 = vsel %vm418, %v591, 0
      %v597 = vsel %vm418, %v592, 0
      %599 = vmatpush.bf16.msra.mxu0 0
      %600 = vmatpush.bf16.msra.mxu0 0
      %601 = vmatpush.bf16.msra.mxu0 0
      %602 = vmatpush.bf16.msra.mxu0 0
      %603 = vmatpush.bf16.msra.mxu0 0
      %604 = vmatpush.bf16.msra.mxu0 0
      %605 = vmatpush.bf16.msra.mxu0 %v565
      %606 = vmatpush.bf16.msra.mxu0 %v563
      %607 = vmatmul.bf16.gmra.mxu0 %v594
      %v608 = vpop.f32.mrf.mxu0
      %v609 = vadd.f32 %v569, %v608
      %v610 = vpop.f32.mrf.mxu0
      %v611 = vadd.f32 %v573, %v610
      %612 = vmatmul.bf16.gmra.mxu0 %v597
      %v613 = vpop.f32.mrf.mxu0
      %v614 = vadd.f32 %v577, %v613
      %v615 = vpop.f32.mrf.mxu0
      %v616 = vadd.f32 %v581, %v615
      %617 = vdwg.mxu0
      %618 = vmatpush.bf16.msra.mxu0 0
      %619 = vmatpush.bf16.msra.mxu0 0
      %620 = vmatpush.bf16.msra.mxu0 0
      %621 = vmatpush.bf16.msra.mxu0 0
      %622 = vmatpush.bf16.msra.mxu0 0
      %623 = vmatpush.bf16.msra.mxu0 0
      %624 = vmatpush.bf16.msra.mxu0 %v566
      %625 = vmatpush.bf16.msra.mxu0 %v564
      %626 = vmatmul.bf16.gmra.mxu0 %v594
      %v627 = vpop.f32.mrf.mxu0
      %v628 = vadd.f32 %v569, %v627
      %v629 = vpop.f32.mrf.mxu0
      %v630 = vadd.f32 %v573, %v629
      %631 = vmatmul.bf16.gmra.mxu0 %v597
      %v632 = vpop.f32.mrf.mxu0
      %v633 = vadd.f32 %v577, %v632
      %v634 = vpop.f32.mrf.mxu0
      %v635 = vadd.f32 %v581, %v634
      %636 = vdwg.mxu0
      %v637 = vmax.f32 %v609, 0.0
      %v638 = vmax.f32 %v628, 0.0
      %v639 = vmax.f32 %v611, 0.0
      %v640 = vmax.f32 %v630, 0.0
      %v641 = vmax.f32 %v614, 0.0
      %v642 = vmax.f32 %v633, 0.0
      %v643 = vmax.f32 %v616, 0.0
      %v644 = vmax.f32 %v635, 0.0
      %v645 = vld [vmem:[%s3] sm:$0xff]
      %v646 = vld [vmem:[%s3 + $0x8] sm:$0xff]
      %v647 = vld [vmem:[%s3 + $0x10] sm:$0xff]
      %v648 = vld [vmem:[%s3 + $0x18] sm:$0xff]
      %650 = vset.pattern.permute.xlu0 0
      %651 = vperm.xlu0 %650, %v645
      %v652 = vpop.permute.xlu0 %651
      %655 = vset.pattern.permute.xlu0 0
      %656 = vperm.xlu0 %655, %v646
      %v657 = vpop.permute.xlu0 %656
      %660 = vset.pattern.permute.xlu0 0
      %661 = vperm.xlu0 %660, %v647
      %v662 = vpop.permute.xlu0 %661
      %665 = vset.pattern.permute.xlu0 0
      %666 = vperm.xlu0 %665, %v648
      %v667 = vpop.permute.xlu0 %666
      %v669 = vmul.f32 %v637, %v652
      %v670 = vmul.f32 %v638, %v652
      %v671 = vmul.f32 %v639, %v657
      %v672 = vmul.f32 %v640, %v657
      %v673 = vmul.f32 %v641, %v662
      %v674 = vmul.f32 %v642, %v662
      %v675 = vmul.f32 %v643, %v667
      %v676 = vmul.f32 %v644, %v667
      %v677 = vadd.f32 %v669, %v671
      %v678 = vadd.f32 %v677, %v673
      %v679 = vadd.f32 %v678, %v675
      %v680 = vrot.slane %v679, 4
      %v681 = vadd.f32 %v679, %v680
      %v682 = vrot.slane %v681, 2
      %v683 = vadd.f32 %v681, %v682
      %v684 = vrot.slane %v683, 1
      %v685 = vadd.f32 %v683, %v684
      %v686 = vadd.f32 %v670, %v672
      %v687 = vadd.f32 %v686, %v674
      %v688 = vadd.f32 %v687, %v676
      %v689 = vrot.slane %v688, 4
      %v690 = vadd.f32 %v688, %v689
      %v691 = vrot.slane %v690, 2
      %v692 = vadd.f32 %v690, %v691
      %v693 = vrot.slane %v692, 1
      %v694 = vadd.f32 %v692, %v693
      %s695 = sld [smem:[#allocation2]]
      %v696 = vstv %s695
      %v697 = vadd.f32 %v685, %v696
      %v698 = vadd.f32 %v694, %v696
      %v701 = vrot.slane %v698, 7
      %vm702 = vcmask 1040384
      %v703 = vsel %vm702, %v697, %v701
      %v705 = vlaneseq
      %vm706 = vcmp.ge.s32.totalorder %v705, 0
      %vm707 = vcmp.lt.s32.totalorder %v705, 256
      %vm708 = vmand %vm706, %vm707
      %709 = vst.msk [vmem:[%s272] sm:$0x3] %vm708, %v703
      %s710 = smul.u32 2, %s18
      %p711 = scmp.lt.s32.totalorder %s710, 3
      %s712 = scalar_select %p711, %s710, 3
      %s713 = scalar_lea.vmem %s6, %s712
      // Predicated region
      $region45: #{discriminator_forward.1} parent=43 // pred_check
        %p714 = pneg %p167
      $region46: #{discriminator_forward.1} parent=43 // pred_check_branch
        %716 = sbr.rel (%p714) target = $region48
      $region47: #{discriminator_forward.1} parent=43 // pred_region
        %s717 = smul.u32 2, %s18
      $region48: #{discriminator_forward.1} parent=43 // pred_fallthru
        _
    $region44: #{discriminator_forward.1} parent=5 // pred_fallthru
      _
    %p718 = scmp.le.s32.totalorder 2, %s13
    // Predicated region
    $region49: #{discriminator_forward.1} parent=5 // pred_check
      %p719 = pneg %p718
    $region50: #{discriminator_forward.1} parent=5 // pred_check_branch
      %721 = sbr.rel (%p719) target = $region52
    $region51: #{discriminator_forward.1} parent=5 // pred_region
      %s722 = ssub.s32 %s13, 2
      // Predicated region
      $region53: #{discriminator_forward.1} parent=51 // pred_check
        %p723 = pneg %p173
      $region54: #{discriminator_forward.1} parent=51 // pred_check_branch
        %725 = sbr.rel (%p723) target = $region56
      $region55: #{discriminator_forward.1} parent=51 // pred_region
        %s726 = smul.u32 2, %s19
        %p727 = scmp.lt.s32.totalorder %s726, 3
        %s728 = scalar_select %p727, %s726, 3
        %s729 = scalar_lea.vmem %s6, %s728
      $region56: #{discriminator_forward.1} parent=51 // pred_fallthru
        _
    $region52: #{discriminator_forward.1} parent=5 // pred_fallthru
      _
  $region6: #{discriminator_forward.1} parent=0 // loop_footer
    %s17 = sadd.s32 1, %s13
  $region7: #{discriminator_forward.1} parent=0 // loop_footer_branch
    %12 = sbr.rel target = $region3
  $region8: #{discriminator_forward.1} parent=0 // loop_exit
    _

</llo_original>
